<compile_context>
chip_gen: v7x
topology: tpu7x:2x2x1
jax: 0.10.0
libtpu: 0.0.40
codegen_flags: <defaults>
</compile_context>

<pallas_src>
import functools

import jax
import jax.numpy as jnp
from jax.experimental import pallas as pl
from jax.experimental.pallas import tpu as pltpu

LANE = 128      # lane-dense padded width for hidden / output feature dims
HIDDEN = 64     # logical hidden width of the PyTorch module
TB_MAX = 1024   # max batch-tile rows per grid step (sweet spot 512-1024)


def _round_up(n, m):
    return ((n + m - 1) // m) * m


def _cdiv(a, b):
    return (a + b - 1) // b


def _choose_tb(batch):
    """Adaptive batch tile: big enough to amortize per-step overhead, small
    enough to match tiny inference batches, and >=2 grid steps when possible
    so v7x can shard the parallel batch axis over both TensorCores."""
    b8 = _round_up(max(batch, 1), 8)
    half = _round_up(_cdiv(b8, 2), 8)          # aim for >= 2 grid steps
    return max(8, min(TB_MAX, half))


def qnet_kernel(x_ref, w1_ref, b1_ref, w2_ref, b2_ref, w3_ref, b3_ref, o_ref):
    # Fully fused 3-layer MLP on one (tb, n_states) activation tile.
    # bf16 MXU matmuls with f32 accumulation; ReLU in f32 then pack to bf16.
    x = x_ref[...].astype(jnp.bfloat16)                               # (tb, n_states)
    h1 = jnp.dot(x, w1_ref[...], preferred_element_type=jnp.float32) + b1_ref[...]
    h1 = jnp.maximum(h1, 0.0).astype(jnp.bfloat16)                    # (tb, 128)
    h2 = jnp.dot(h1, w2_ref[...], preferred_element_type=jnp.float32) + b2_ref[...]
    h2 = jnp.maximum(h2, 0.0).astype(jnp.bfloat16)                    # (tb, 128)
    out = jnp.dot(h2, w3_ref[...], preferred_element_type=jnp.float32) + b3_ref[...]
    o_ref[...] = out.astype(o_ref.dtype)                              # (tb, 128) bf16


@functools.partial(jax.jit, static_argnames=("n_actions",))
def qnetwork_forward(x, params, *, n_actions):
    """x: (B, n_states) float32.  Returns (B, n_actions) float32.

    Semantics match the PyTorch QNetwork forward (up to bf16 weight /
    activation / output rounding).
    """
    B, n_states = x.shape
    pad_out = params["w3"].shape[1]
    tb = _choose_tb(B)
    grid = (_cdiv(B, tb),)

    def resident(a):
        # Weights/biases: constant block index across the grid -> fetched once,
        # stay VMEM-resident while x/out tiles stream.
        return pl.BlockSpec(a.shape, lambda i: (0,) * a.ndim)

    out_pad = pl.pallas_call(
        qnet_kernel,
        out_shape=jax.ShapeDtypeStruct((B, pad_out), jnp.bfloat16),
        grid=grid,
        in_specs=[
            # Streamed x tile, unpadded: last block dim == full array extent
            # (legal even when n_states < 128). Boundary block rows beyond B
            # are undefined but rows never mix and their outputs are masked.
            pl.BlockSpec((tb, n_states), lambda i: (i, 0)),
            resident(params["w1"]), resident(params["b1"]),
            resident(params["w2"]), resident(params["b2"]),
            resident(params["w3"]), resident(params["b3"]),
        ],
        out_specs=pl.BlockSpec((tb, pad_out), lambda i: (i, 0)),
        compiler_params=pltpu.CompilerParams(
            dimension_semantics=("parallel",),
        ),
    )(x, params["w1"], params["b1"], params["w2"], params["b2"],
      params["w3"], params["b3"])

    # Tiny slice + cast; downstream TD-error math stays in f32.
    return out_pad[:, :n_actions].astype(jnp.float32)


def init_params(key, n_states, n_actions):
    """PyTorch-Linear-style init U(-1/sqrt(fan_in), 1/sqrt(fan_in)), stored as
    (in, out) = weight.T.  Layer-1 keeps its true contraction dim (n_states);
    hidden/output dims are zero-padded to 128 lanes (mathematically inert).
    Weights bf16, biases f32."""
    pad_h = _round_up(HIDDEN, LANE)
    pad_out = _round_up(n_actions, LANE)

    def linear(key, fan_in, fan_out, pin, pout):
        kw, kb = jax.random.split(key)
        bound = 1.0 / jnp.sqrt(fan_in)
        w = jax.random.uniform(kw, (fan_in, fan_out), jnp.float32, -bound, bound)
        b = jax.random.uniform(kb, (1, fan_out), jnp.float32, -bound, bound)
        w_p = jnp.zeros((pin, pout), jnp.bfloat16).at[:fan_in, :fan_out].set(
            w.astype(jnp.bfloat16))
        b_p = jnp.zeros((1, pout), jnp.float32).at[:, :fan_out].set(b)
        return w_p, b_p

    k1, k2, k3 = jax.random.split(key, 3)
    w1, b1 = linear(k1, n_states, HIDDEN, n_states, pad_h)   # (n_states, 128)
    w2, b2 = linear(k2, HIDDEN, HIDDEN, pad_h, pad_h)        # (128, 128)
    w3, b3 = linear(k3, HIDDEN, n_actions, pad_h, pad_out)   # (128, 128)
    return {"w1": w1, "b1": b1, "w2": w2, "b2": b2, "w3": w3, "b3": b3}


if __name__ == "__main__":
    key = jax.random.PRNGKey(0)
    k_params, k_x = jax.random.split(key)

    n_states, n_actions, batch = 8, 4, 2
    params = init_params(k_params, n_states, n_actions)
    x = jax.random.normal(k_x, (batch, n_states), jnp.float32)

    out = qnetwork_forward(x, params, n_actions=n_actions)
    out = jax.block_until_ready(out)

    # Reference in plain JAX with the same bf16-rounded weights/activations
    # (unpadded slices), f32 accumulation — matches the kernel's math up to the
    # final bf16 output rounding (hence the looser tolerance).
    xw = x.astype(jnp.bfloat16).astype(jnp.float32)
    w1 = params["w1"][:n_states, :HIDDEN].astype(jnp.float32)
    w2 = params["w2"][:HIDDEN, :HIDDEN].astype(jnp.float32)
    w3 = params["w3"][:HIDDEN, :n_actions].astype(jnp.float32)
    b1 = params["b1"][:, :HIDDEN]
    b2 = params["b2"][:, :HIDDEN]
    b3 = params["b3"][:, :n_actions]
    h1 = jnp.maximum(xw @ w1 + b1, 0.0).astype(jnp.bfloat16).astype(jnp.float32)
    h2 = jnp.maximum(h1 @ w2 + b2, 0.0).astype(jnp.bfloat16).astype(jnp.float32)
    ref = h2 @ w3 + b3

    assert out.shape == (batch, n_actions)
    assert jnp.allclose(out, ref, atol=3e-2, rtol=3e-2), (out, ref)

    print("KERNEL_OK")
</pallas_src>

<mosaic_0001>
module attributes {stable_mosaic.version = 11 : i64} {
  func.func @qnet_kernel(%arg0: i32, %arg1: memref<8x8xf32, #tpu.memory_space<vmem>>, %arg2: memref<8x128xbf16, #tpu.memory_space<vmem>>, %arg3: memref<1x128xf32, #tpu.memory_space<vmem>>, %arg4: memref<128x128xbf16, #tpu.memory_space<vmem>>, %arg5: memref<1x128xf32, #tpu.memory_space<vmem>>, %arg6: memref<128x128xbf16, #tpu.memory_space<vmem>>, %arg7: memref<1x128xf32, #tpu.memory_space<vmem>>, %arg8: memref<8x128xbf16, #tpu.memory_space<vmem>>) attributes {dimension_semantics = [#tpu.dimension_semantics<parallel>], iteration_bounds = array<i64: 1>, scalar_prefetch = 0 : i64, scratch_operands = 0 : i64, tpu.core_type = #tpu.core_type<tc>, window_params = [{transform_indices = @transform_0, window_bounds = array<i64: 8, 8>}, {pipeline_mode = #tpu.pipeline_mode<synchronous>, transform_indices = @transform_1, window_bounds = array<i64: 8, 128>}, {pipeline_mode = #tpu.pipeline_mode<synchronous>, transform_indices = @transform_2, window_bounds = array<i64: 1, 128>}, {pipeline_mode = #tpu.pipeline_mode<synchronous>, transform_indices = @transform_3, window_bounds = array<i64: 128, 128>}, {pipeline_mode = #tpu.pipeline_mode<synchronous>, transform_indices = @transform_4, window_bounds = array<i64: 1, 128>}, {pipeline_mode = #tpu.pipeline_mode<synchronous>, transform_indices = @transform_5, window_bounds = array<i64: 128, 128>}, {pipeline_mode = #tpu.pipeline_mode<synchronous>, transform_indices = @transform_6, window_bounds = array<i64: 1, 128>}, {transform_indices = @transform_7, window_bounds = array<i64: 8, 128>}]} {
    %c0 = arith.constant 0 : index
    %c0_0 = arith.constant 0 : index
    %0 = vector.load %arg1[%c0, %c0_0] : memref<8x8xf32, #tpu.memory_space<vmem>>, vector<8x8xf32>
    %1 = arith.truncf %0 : vector<8x8xf32> to vector<8x8xbf16>
    %c0_1 = arith.constant 0 : index
    %c0_2 = arith.constant 0 : index
    %2 = vector.load %arg2[%c0_1, %c0_2] : memref<8x128xbf16, #tpu.memory_space<vmem>>, vector<8x128xbf16>
    %cst = arith.constant dense<0.000000e+00> : vector<8x128xf32>
    %3 = tpu.matmul %1, %2, %cst {dimension_numbers = #tpu.dot_dimension_numbers<[1], [0], [0], [1], [0, 0, 1, 1], [], []>} : vector<8x8xbf16>, vector<8x128xbf16>, vector<8x128xf32> -> vector<8x128xf32>
    %c0_3 = arith.constant 0 : index
    %c0_4 = arith.constant 0 : index
    %4 = vector.load %arg3[%c0_3, %c0_4] : memref<1x128xf32, #tpu.memory_space<vmem>>, vector<1x128xf32>
    %5 = vector.broadcast %4 : vector<1x128xf32> to vector<8x128xf32>
    %6 = arith.addf %3, %5 : vector<8x128xf32>
    %cst_5 = arith.constant 0.000000e+00 : f32
    %7 = vector.broadcast %cst_5 : f32 to vector<8x128xf32>
    %8 = arith.maximumf %6, %7 : vector<8x128xf32>
    %9 = arith.truncf %8 : vector<8x128xf32> to vector<8x128xbf16>
    %c0_6 = arith.constant 0 : index
    %c0_7 = arith.constant 0 : index
    %10 = vector.load %arg4[%c0_6, %c0_7] : memref<128x128xbf16, #tpu.memory_space<vmem>>, vector<128x128xbf16>
    %cst_8 = arith.constant dense<0.000000e+00> : vector<8x128xf32>
    %11 = tpu.matmul %9, %10, %cst_8 {dimension_numbers = #tpu.dot_dimension_numbers<[1], [0], [0], [1], [0, 0, 1, 1], [], []>} : vector<8x128xbf16>, vector<128x128xbf16>, vector<8x128xf32> -> vector<8x128xf32>
    %c0_9 = arith.constant 0 : index
    %c0_10 = arith.constant 0 : index
    %12 = vector.load %arg5[%c0_9, %c0_10] : memref<1x128xf32, #tpu.memory_space<vmem>>, vector<1x128xf32>
    %13 = vector.broadcast %12 : vector<1x128xf32> to vector<8x128xf32>
    %14 = arith.addf %11, %13 : vector<8x128xf32>
    %cst_11 = arith.constant 0.000000e+00 : f32
    %15 = vector.broadcast %cst_11 : f32 to vector<8x128xf32>
    %16 = arith.maximumf %14, %15 : vector<8x128xf32>
    %17 = arith.truncf %16 : vector<8x128xf32> to vector<8x128xbf16>
    %c0_12 = arith.constant 0 : index
    %c0_13 = arith.constant 0 : index
    %18 = vector.load %arg6[%c0_12, %c0_13] : memref<128x128xbf16, #tpu.memory_space<vmem>>, vector<128x128xbf16>
    %cst_14 = arith.constant dense<0.000000e+00> : vector<8x128xf32>
    %19 = tpu.matmul %17, %18, %cst_14 {dimension_numbers = #tpu.dot_dimension_numbers<[1], [0], [0], [1], [0, 0, 1, 1], [], []>} : vector<8x128xbf16>, vector<128x128xbf16>, vector<8x128xf32> -> vector<8x128xf32>
    %c0_15 = arith.constant 0 : index
    %c0_16 = arith.constant 0 : index
    %20 = vector.load %arg7[%c0_15, %c0_16] : memref<1x128xf32, #tpu.memory_space<vmem>>, vector<1x128xf32>
    %21 = vector.broadcast %20 : vector<1x128xf32> to vector<8x128xf32>
    %22 = arith.addf %19, %21 : vector<8x128xf32>
    %23 = arith.truncf %22 : vector<8x128xf32> to vector<8x128xbf16>
    %c0_17 = arith.constant 0 : index
    %c0_18 = arith.constant 0 : index
    %24 = vector.load %arg8[%c0_17, %c0_18] : memref<8x128xbf16, #tpu.memory_space<vmem>>, vector<8x128xbf16>
    tpu.vector_store %arg8[%c0_17, %c0_18], %23 {strides = array<i32>} : memref<8x128xbf16, #tpu.memory_space<vmem>>, vector<8x128xbf16>,
    return
  }
  func.func @transform_0(%arg0: i32) -> (i32, i32) {
    %c0_i32 = arith.constant 0 : i32
    %c0_i32_0 = arith.constant 0 : i32
    return %arg0, %c0_i32 : i32, i32
  }
  func.func @transform_1(%arg0: i32) -> (i32, i32) {
    %c0_i32 = arith.constant 0 : i32
    %c0_i32_0 = arith.constant 0 : i32
    %c0_i32_1 = arith.constant 0 : i32
    return %c0_i32, %c0_i32_0 : i32, i32
  }
  func.func @transform_2(%arg0: i32) -> (i32, i32) {
    %c0_i32 = arith.constant 0 : i32
    %c0_i32_0 = arith.constant 0 : i32
    %c0_i32_1 = arith.constant 0 : i32
    return %c0_i32, %c0_i32_0 : i32, i32
  }
  func.func @transform_3(%arg0: i32) -> (i32, i32) {
    %c0_i32 = arith.constant 0 : i32
    %c0_i32_0 = arith.constant 0 : i32
    %c0_i32_1 = arith.constant 0 : i32
    return %c0_i32, %c0_i32_0 : i32, i32
  }
  func.func @transform_4(%arg0: i32) -> (i32, i32) {
    %c0_i32 = arith.constant 0 : i32
    %c0_i32_0 = arith.constant 0 : i32
    %c0_i32_1 = arith.constant 0 : i32
    return %c0_i32, %c0_i32_0 : i32, i32
  }
  func.func @transform_5(%arg0: i32) -> (i32, i32) {
    %c0_i32 = arith.constant 0 : i32
    %c0_i32_0 = arith.constant 0 : i32
    %c0_i32_1 = arith.constant 0 : i32
    return %c0_i32, %c0_i32_0 : i32, i32
  }
  func.func @transform_6(%arg0: i32) -> (i32, i32) {
    %c0_i32 = arith.constant 0 : i32
    %c0_i32_0 = arith.constant 0 : i32
    %c0_i32_1 = arith.constant 0 : i32
    return %c0_i32, %c0_i32_0 : i32, i32
  }
  func.func @transform_7(%arg0: i32) -> (i32, i32) {
    %c0_i32 = arith.constant 0 : i32
    %c0_i32_0 = arith.constant 0 : i32
    return %arg0, %c0_i32 : i32, i32
  }
}

</mosaic_0001>

<llo_original>
// kernel: qnetwork_forward.1
$region0: #{qnetwork_forward.1}
  #allocation0 [shape = 'u32[]', space=smem, size = 0x4, offset = 0x4, fixed_abs, tag = 'smem constant byte address 0x4 - core index']
  #allocation1 [shape = 'u32[144,128]{1,0:T(1,128)}', space=vmem, size = 0x12000, scoped, tag = 'internal scratch']
  %s0 = inlined_call_operand.hbm [shape: f32[2,8], index: 0, kind: input, shape index: {}]
  %s1 = inlined_call_operand.vmem [shape: bf16[8,128], index: 1, kind: input, shape index: {}]
  %s2 = inlined_call_operand.vmem [shape: f32[1,128], index: 2, kind: input, shape index: {}]
  %s3 = inlined_call_operand.hbm [shape: bf16[128,128], index: 3, kind: input, shape index: {}]
  %s4 = inlined_call_operand.vmem [shape: f32[1,128], index: 4, kind: input, shape index: {}]
  %s5 = inlined_call_operand.hbm [shape: bf16[128,128], index: 5, kind: input, shape index: {}]
  %s6 = inlined_call_operand.vmem [shape: f32[1,128], index: 6, kind: input, shape index: {}]
  %s7 = inlined_call_operand.vmem [shape: bf16[2,128], index: 7, kind: output, shape index: {}]
  %s8 = sld [smem:[#allocation0]]
  $region80: #{qnetwork_forward.1} parent=0
    _
  %s10 = ssub.s32 1, %s8
  %s11 = scalar_select 0, %s10, %s8
  $region1: #{qnetwork_forward.1} parent=0
    #allocation2 [shape = 'u8[4096]{0}', space=vmem, size = 0x1000, scoped, tag = 'input window, operand 0, single buffered']
    #allocation3 [shape = 's32[1]{0}', space=sflag, size = 0x4, scoped, tag = 'scoped memory for qnetwork_forward.1']
    #allocation4 [shape = 'u8[32768]{0}', space=vmem, size = 0x8000, scoped, tag = 'input window, operand 3, single buffered']
    #allocation5 [shape = 's32[1]{0}', space=sflag, size = 0x4, scoped, tag = 'scoped memory for qnetwork_forward.1']
    #allocation6 [shape = 'u8[32768]{0}', space=vmem, size = 0x8000, scoped, tag = 'input window, operand 5, single buffered']
    #allocation7 [shape = 'u8[2048]{0}', space=vmem, size = 0x800, scoped, tag = 'output window, operand 0, single buffered']
    %12 = vsyncpa [#allocation3], 0
    %13 = vsyncpa [#allocation5], 0
    // Predicated region
    $region2: #{qnetwork_forward.1} parent=1 // pred_check
      _
    $region3: #{qnetwork_forward.1} parent=1 // pred_check_branch
      %15 = sbr.rel (0) target = $region5
    $region4: #{qnetwork_forward.1} parent=1 // pred_region
      %s17 = ssub.s32 128, 32
      %18 = vsyncadd [#allocation3], %s17
      %s19 = sshll.u32 [#allocation2], 4
      %s20 = int_to_ptr.vmem [resolvable:$true] %s19
      %25 = dma.hbm_to_vmem [thread:$0]  %s0, 32, %s20, [#allocation3], 32, 32, 2
    $region5: #{qnetwork_forward.1} parent=1 // pred_fallthru
      _
    // Predicated region
    $region6: #{qnetwork_forward.1} parent=1 // pred_check
      _
    $region7: #{qnetwork_forward.1} parent=1 // pred_check_branch
      %27 = sbr.rel (0) target = $region9
    $region8: #{qnetwork_forward.1} parent=1 // pred_region
      _
    $region9: #{qnetwork_forward.1} parent=1 // pred_fallthru
      _
    // Predicated region
    $region10: #{qnetwork_forward.1} parent=1 // pred_check
      _
    $region11: #{qnetwork_forward.1} parent=1 // pred_check_branch
      %29 = sbr.rel (0) target = $region13
    $region12: #{qnetwork_forward.1} parent=1 // pred_region
      _
    $region13: #{qnetwork_forward.1} parent=1 // pred_fallthru
      _
    // Predicated region
    $region14: #{qnetwork_forward.1} parent=1 // pred_check
      _
    $region15: #{qnetwork_forward.1} parent=1 // pred_check_branch
      %31 = sbr.rel (0) target = $region17
    $region16: #{qnetwork_forward.1} parent=1 // pred_region
      %s33 = ssub.s32 1024, 1024
      %34 = vsyncadd [#allocation5], %s33
      %s35 = sshll.u32 [#allocation4], 4
      %s36 = int_to_ptr.vmem [resolvable:$true] %s35
      %41 = dma.hbm_to_vmem [thread:$0]  %s3, 1024, %s36, [#allocation5], 64, 64, 4
    $region17: #{qnetwork_forward.1} parent=1 // pred_fallthru
      _
    // Predicated region
    $region18: #{qnetwork_forward.1} parent=1 // pred_check
      _
    $region19: #{qnetwork_forward.1} parent=1 // pred_check_branch
      %43 = sbr.rel (0) target = $region21
    $region20: #{qnetwork_forward.1} parent=1 // pred_region
      _
    $region21: #{qnetwork_forward.1} parent=1 // pred_fallthru
      _
    // Predicated region
    $region22: #{qnetwork_forward.1} parent=1 // pred_check
      _
    $region23: #{qnetwork_forward.1} parent=1 // pred_check_branch
      %45 = sbr.rel (0) target = $region25
    $region24: #{qnetwork_forward.1} parent=1 // pred_region
      %s47 = ssub.s32 1024, 1024
      %48 = vsyncadd [#allocation5], %s47
      %s49 = sshll.u32 [#allocation6], 4
      %s50 = int_to_ptr.vmem [resolvable:$true] %s49
      %55 = dma.hbm_to_vmem [thread:$0]  %s5, 1024, %s50, [#allocation5], 64, 64, 4
    $region25: #{qnetwork_forward.1} parent=1 // pred_fallthru
      _
    // Predicated region
    $region26: #{qnetwork_forward.1} parent=1 // pred_check
      _
    $region27: #{qnetwork_forward.1} parent=1 // pred_check_branch
      %57 = sbr.rel (0) target = $region29
    $region28: #{qnetwork_forward.1} parent=1 // pred_region
      _
    $region29: #{qnetwork_forward.1} parent=1 // pred_fallthru
      _
    // Predicated region
    $region30: #{qnetwork_forward.1} parent=1 // pred_check
      _
    $region31: #{qnetwork_forward.1} parent=1 // pred_check_branch
      %59 = sbr.rel (0) target = $region33
    $region32: #{qnetwork_forward.1} parent=1 // pred_region
      %60 = dma.done [#allocation3], 128
    $region33: #{qnetwork_forward.1} parent=1 // pred_fallthru
      _
    // Predicated region
    $region34: #{qnetwork_forward.1} parent=1 // pred_check
      _
    $region35: #{qnetwork_forward.1} parent=1 // pred_check_branch
      %62 = sbr.rel (0) target = $region37
    $region36: #{qnetwork_forward.1} parent=1 // pred_region
      %63 = dma.done [#allocation5], 1024
    $region37: #{qnetwork_forward.1} parent=1 // pred_fallthru
      _
    // Predicated region
    $region38: #{qnetwork_forward.1} parent=1 // pred_check
      _
    $region39: #{qnetwork_forward.1} parent=1 // pred_check_branch
      %65 = sbr.rel (0) target = $region41
    $region40: #{qnetwork_forward.1} parent=1 // pred_region
      %66 = dma.done [#allocation5], 1024
    $region41: #{qnetwork_forward.1} parent=1 // pred_fallthru
      _
    %v68 = vld [vmem:[#allocation2] sm:$0xff]
    %v69 = vpack.c.bf16 %v68, %v68
    %v70 = vld [vmem:[%s1] sm:$0xf]
    %v71 = vld [vmem:[%s2] sm:$0x1]
    %v73 = vlaneseq
    %v74 = vshrl.u32 %v73, 7
    %v75 = vsub.s32 0, %v74
    %v76 = vrot.slane %v71, %v75
    %vm78 = vcmask 64512
    %v80 = vsel %vm78, %v69, 0
    %vm82 = vcmask 1043456
    %v84 = vsel %vm82, %v70, 0
    %86 = vmatprep.subr.bf16.mxu0 0
    %87 = vmatpush1.bf16.msra.mxu0 %v84
    %88 = vmatprep.subr.bf16.mxu0 0
    %89 = vmatpush1.bf16.msra.mxu0 0
    %90 = vmatprep.subr.bf16.mxu0 0
    %91 = vmatpush1.bf16.msra.mxu0 0
    %92 = vmatprep.subr.bf16.mxu0 0
    %93 = vmatpush1.bf16.msra.mxu0 0
    %94 = vmatprep.subr.bf16.mxu0 0
    %95 = vmatpush1.bf16.msra.mxu0 0
    %96 = vmatprep.subr.bf16.mxu0 0
    %97 = vmatpush1.bf16.msra.mxu0 0
    %98 = vmatprep.subr.bf16.mxu0 0
    %99 = vmatpush1.bf16.msra.mxu0 0
    %100 = vmatprep.subr.bf16.mxu0 0
    %101 = vmatpush1.bf16.msra.mxu0 0
    %102 = vmatprep.subr.bf16.mxu0 0
    %103 = vmatpush1.bf16.msra.mxu0 0
    %104 = vmatprep.subr.bf16.mxu0 0
    %105 = vmatpush1.bf16.msra.mxu0 0
    %106 = vmatprep.subr.bf16.mxu0 0
    %107 = vmatpush1.bf16.msra.mxu0 0
    %108 = vmatprep.subr.bf16.mxu0 0
    %109 = vmatpush1.bf16.msra.mxu0 0
    %110 = vmatprep.subr.bf16.mxu0 0
    %111 = vmatpush1.bf16.msra.mxu0 0
    %112 = vmatprep.subr.bf16.mxu0 0
    %113 = vmatpush1.bf16.msra.mxu0 0
    %114 = vmatprep.subr.bf16.mxu0 0
    %115 = vmatpush1.bf16.msra.mxu0 0
    %116 = vmatprep.subr.bf16.mxu0 0
    %117 = vmatpush1.bf16.msra.mxu0 0
    %118 = vmatprep.mubr.bf16.mxu0 0
    %119 = vmatmul.mubr.bf16.gmra.mrb[0].mxu0 %v80
    %v120 = vpop.f32.mrb[0].mxu0
    %v121 = vadd.f32 %v76, %v120
    %v122 = vpop.f32.mrb[0].mxu0
    %v123 = vpop.f32.mrb[0].mxu0
    %v124 = vpop.f32.mrb[0].mxu0
    %125 = vdwg.mxu0
    %v126 = vmax.f32 %v121, 0.0
    %v127 = vpack.c.bf16 %v126, %v126
    %v128 = vld [vmem:[#allocation4] sm:$0xf]
    %v129 = vld [vmem:[#allocation4 + $0x4] sm:$0xf]
    %v130 = vld [vmem:[#allocation4 + $0x8] sm:$0xf]
    %v131 = vld [vmem:[#allocation4 + $0xc] sm:$0xf]
    %v132 = vld [vmem:[#allocation4 + $0x10] sm:$0xf]
    %v133 = vld [vmem:[#allocation4 + $0x14] sm:$0xf]
    %v134 = vld [vmem:[#allocation4 + $0x18] sm:$0xf]
    %v135 = vld [vmem:[#allocation4 + $0x1c] sm:$0xf]
    %v136 = vld [vmem:[#allocation4 + $0x20] sm:$0xf]
    %v137 = vld [vmem:[#allocation4 + $0x24] sm:$0xf]
    %v138 = vld [vmem:[#allocation4 + $0x28] sm:$0xf]
    %v139 = vld [vmem:[#allocation4 + $0x2c] sm:$0xf]
    %v140 = vld [vmem:[#allocation4 + $0x30] sm:$0xf]
    %v141 = vld [vmem:[#allocation4 + $0x34] sm:$0xf]
    %v142 = vld [vmem:[#allocation4 + $0x38] sm:$0xf]
    %v143 = vld [vmem:[#allocation4 + $0x3c] sm:$0xf]
    %v144 = vld [vmem:[%s4] sm:$0x1]
    %v146 = vlaneseq
    %v147 = vshrl.u32 %v146, 7
    %v148 = vsub.s32 0, %v147
    %v149 = vrot.slane %v144, %v148
    %v167 = vunpack.c.l.b16 %v128
    %v168 = vunpack.c.l.b16 %v129
    %v169 = vunpack.c.l.b16 %v130
    %v170 = vunpack.c.l.b16 %v131
    %v171 = vunpack.c.l.b16 %v132
    %v172 = vunpack.c.l.b16 %v133
    %v173 = vunpack.c.l.b16 %v134
    %v174 = vunpack.c.l.b16 %v135
    %v175 = vunpack.c.l.b16 %v136
    %v176 = vunpack.c.l.b16 %v137
    %v177 = vunpack.c.l.b16 %v138
    %v178 = vunpack.c.l.b16 %v139
    %v179 = vunpack.c.l.b16 %v140
    %v180 = vunpack.c.l.b16 %v141
    %v181 = vunpack.c.l.b16 %v142
    %v182 = vunpack.c.l.b16 %v143
    %v183 = vpack.c.b16 %v168, %v167
    %v184 = vpack.c.b16 %v170, %v169
    %v185 = vpack.c.b16 %v172, %v171
    %v186 = vpack.c.b16 %v174, %v173
    %v187 = vpack.c.b16 %v176, %v175
    %v188 = vpack.c.b16 %v178, %v177
    %v189 = vpack.c.b16 %v180, %v179
    %v190 = vpack.c.b16 %v182, %v181
    %199 = vmatprep.subr.bf16.mxu0 0
    %200 = vmatpush1.bf16.msra.mxu0 %v183
    %201 = vmatprep.subr.bf16.mxu0 0
    %202 = vmatpush1.bf16.msra.mxu0 %v184
    %203 = vmatprep.subr.bf16.mxu0 0
    %204 = vmatpush1.bf16.msra.mxu0 %v185
    %205 = vmatprep.subr.bf16.mxu0 0
    %206 = vmatpush1.bf16.msra.mxu0 %v186
    %207 = vmatprep.subr.bf16.mxu0 0
    %208 = vmatpush1.bf16.msra.mxu0 %v187
    %209 = vmatprep.subr.bf16.mxu0 0
    %210 = vmatpush1.bf16.msra.mxu0 %v188
    %211 = vmatprep.subr.bf16.mxu0 0
    %212 = vmatpush1.bf16.msra.mxu0 %v189
    %213 = vmatprep.subr.bf16.mxu0 0
    %214 = vmatpush1.bf16.msra.mxu0 %v190
    %215 = vmatprep.subr.bf16.mxu0 0
    %216 = vmatpush1.bf16.msra.mxu0 0
    %217 = vmatprep.subr.bf16.mxu0 0
    %218 = vmatpush1.bf16.msra.mxu0 0
    %219 = vmatprep.subr.bf16.mxu0 0
    %220 = vmatpush1.bf16.msra.mxu0 0
    %221 = vmatprep.subr.bf16.mxu0 0
    %222 = vmatpush1.bf16.msra.mxu0 0
    %223 = vmatprep.subr.bf16.mxu0 0
    %224 = vmatpush1.bf16.msra.mxu0 0
    %225 = vmatprep.subr.bf16.mxu0 0
    %226 = vmatpush1.bf16.msra.mxu0 0
    %227 = vmatprep.subr.bf16.mxu0 0
    %228 = vmatpush1.bf16.msra.mxu0 0
    %229 = vmatprep.subr.bf16.mxu0 0
    %230 = vmatpush1.bf16.msra.mxu0 0
    %231 = vmatprep.mubr.bf16.mxu0 0
    %232 = vmatmul.mubr.bf16.gmra.mrb[0].mxu0 %v127
    %v233 = vpop.f32.mrb[0].mxu0
    %v234 = vadd.f32 %v149, %v233
    %v235 = vpop.f32.mrb[0].mxu0
    %v236 = vpop.f32.mrb[0].mxu0
    %v237 = vpop.f32.mrb[0].mxu0
    %238 = vdwg.mxu0
    %v239 = vmax.f32 %v234, 0.0
    %v240 = vpack.c.bf16 %v239, %v239
    %v241 = vld [vmem:[#allocation6] sm:$0xf]
    %v242 = vld [vmem:[#allocation6 + $0x4] sm:$0xf]
    %v243 = vld [vmem:[#allocation6 + $0x8] sm:$0xf]
    %v244 = vld [vmem:[#allocation6 + $0xc] sm:$0xf]
    %v245 = vld [vmem:[#allocation6 + $0x10] sm:$0xf]
    %v246 = vld [vmem:[#allocation6 + $0x14] sm:$0xf]
    %v247 = vld [vmem:[#allocation6 + $0x18] sm:$0xf]
    %v248 = vld [vmem:[#allocation6 + $0x1c] sm:$0xf]
    %v249 = vld [vmem:[#allocation6 + $0x20] sm:$0xf]
    %v250 = vld [vmem:[#allocation6 + $0x24] sm:$0xf]
    %v251 = vld [vmem:[#allocation6 + $0x28] sm:$0xf]
    %v252 = vld [vmem:[#allocation6 + $0x2c] sm:$0xf]
    %v253 = vld [vmem:[#allocation6 + $0x30] sm:$0xf]
    %v254 = vld [vmem:[#allocation6 + $0x34] sm:$0xf]
    %v255 = vld [vmem:[#allocation6 + $0x38] sm:$0xf]
    %v256 = vld [vmem:[#allocation6 + $0x3c] sm:$0xf]
    %v257 = vld [vmem:[%s6] sm:$0x1]
    %v259 = vlaneseq
    %v260 = vshrl.u32 %v259, 7
    %v261 = vsub.s32 0, %v260
    %v262 = vrot.slane %v257, %v261
    %v280 = vunpack.c.l.b16 %v241
    %v281 = vunpack.c.l.b16 %v242
    %v282 = vunpack.c.l.b16 %v243
    %v283 = vunpack.c.l.b16 %v244
    %v284 = vunpack.c.l.b16 %v245
    %v285 = vunpack.c.l.b16 %v246
    %v286 = vunpack.c.l.b16 %v247
    %v287 = vunpack.c.l.b16 %v248
    %v288 = vunpack.c.l.b16 %v249
    %v289 = vunpack.c.l.b16 %v250
    %v290 = vunpack.c.l.b16 %v251
    %v291 = vunpack.c.l.b16 %v252
    %v292 = vunpack.c.l.b16 %v253
    %v293 = vunpack.c.l.b16 %v254
    %v294 = vunpack.c.l.b16 %v255
    %v295 = vunpack.c.l.b16 %v256
    %v296 = vpack.c.b16 %v281, %v280
    %v297 = vpack.c.b16 %v283, %v282
    %v298 = vpack.c.b16 %v285, %v284
    %v299 = vpack.c.b16 %v287, %v286
    %v300 = vpack.c.b16 %v289, %v288
    %v301 = vpack.c.b16 %v291, %v290
    %v302 = vpack.c.b16 %v293, %v292
    %v303 = vpack.c.b16 %v295, %v294
    %312 = vmatprep.subr.bf16.mxu0 0
    %313 = vmatpush1.bf16.msra.mxu0 %v296
    %314 = vmatprep.subr.bf16.mxu0 0
    %315 = vmatpush1.bf16.msra.mxu0 %v297
    %316 = vmatprep.subr.bf16.mxu0 0
    %317 = vmatpush1.bf16.msra.mxu0 %v298
    %318 = vmatprep.subr.bf16.mxu0 0
    %319 = vmatpush1.bf16.msra.mxu0 %v299
    %320 = vmatprep.subr.bf16.mxu0 0
    %321 = vmatpush1.bf16.msra.mxu0 %v300
    %322 = vmatprep.subr.bf16.mxu0 0
    %323 = vmatpush1.bf16.msra.mxu0 %v301
    %324 = vmatprep.subr.bf16.mxu0 0
    %325 = vmatpush1.bf16.msra.mxu0 %v302
    %326 = vmatprep.subr.bf16.mxu0 0
    %327 = vmatpush1.bf16.msra.mxu0 %v303
    %328 = vmatprep.subr.bf16.mxu0 0
    %329 = vmatpush1.bf16.msra.mxu0 0
    %330 = vmatprep.subr.bf16.mxu0 0
    %331 = vmatpush1.bf16.msra.mxu0 0
    %332 = vmatprep.subr.bf16.mxu0 0
    %333 = vmatpush1.bf16.msra.mxu0 0
    %334 = vmatprep.subr.bf16.mxu0 0
    %335 = vmatpush1.bf16.msra.mxu0 0
    %336 = vmatprep.subr.bf16.mxu0 0
    %337 = vmatpush1.bf16.msra.mxu0 0
    %338 = vmatprep.subr.bf16.mxu0 0
    %339 = vmatpush1.bf16.msra.mxu0 0
    %340 = vmatprep.subr.bf16.mxu0 0
    %341 = vmatpush1.bf16.msra.mxu0 0
    %342 = vmatprep.subr.bf16.mxu0 0
    %343 = vmatpush1.bf16.msra.mxu0 0
    %344 = vmatprep.mubr.bf16.mxu0 0
    %345 = vmatmul.mubr.bf16.gmra.mrb[0].mxu0 %v240
    %v346 = vpop.f32.mrb[0].mxu0
    %v347 = vadd.f32 %v262, %v346
    %v348 = vpop.f32.mrb[0].mxu0
    %v349 = vpop.f32.mrb[0].mxu0
    %v350 = vpop.f32.mrb[0].mxu0
    %351 = vdwg.mxu0
    %v352 = vpack.c.bf16 %v347, %v347
    %v355 = vunpack.c.l.s4 1966171168
    %v356 = vunpack.c.0.s8 %v355
    %v357 = vlaneseq
    %v358 = vshrl.u32 %v357, 7
    %v359 = vsub.s32 %v356, %v358
    %v360 = vrot.slane %v352, %v359
    %v361 = vcombine.high %v360, %v360
    %v363 = vunpack.c.l.s4 1966171168
    %v364 = vunpack.c.0.s8 %v363
    %v365 = vlaneseq
    %v366 = vshrl.u32 %v365, 7
    %v367 = vsub.s32 %v364, %v366
    %v368 = vrot.slane %v360, %v367
    %v370 = vunpack.c.l.s4 1966171168
    %v371 = vunpack.c.0.s8 %v370
    %v372 = vlaneseq
    %v373 = vshrl.u32 %v372, 7
    %v374 = vsub.s32 %v371, %v373
    %v375 = vrot.slane %v361, %v374
    %v376 = vcombine.high %v368, %v368
    %v377 = vcombine.high %v375, %v375
    %382 = vst [vmem:[#allocation7] sm:$0x1] %v368
    %383 = vst [vmem:[#allocation7 + $0x1] sm:$0x1] %v375
    %384 = vst [vmem:[#allocation7 + $0x2] sm:$0x1] %v376
    %385 = vst [vmem:[#allocation7 + $0x3] sm:$0x1] %v377
    // Predicated region
    $region42: #{qnetwork_forward.1} parent=1 // pred_check
      _
    $region43: #{qnetwork_forward.1} parent=1 // pred_check_branch
      %387 = sbr.rel (0) target = $region45
    $region44: #{qnetwork_forward.1} parent=1 // pred_region
      // Predicated region
      $region46: #{qnetwork_forward.1} parent=44 // pred_check
        _
      $region47: #{qnetwork_forward.1} parent=44 // pred_check_branch
        %389 = sbr.rel (0) target = $region49
      $region48: #{qnetwork_forward.1} parent=44 // pred_region
        // Predicated region
        $region50: #{qnetwork_forward.1} parent=48 // pred_check
          _
        $region51: #{qnetwork_forward.1} parent=48 // pred_check_branch
          %391 = sbr.rel target = $region53
        $region52: #{qnetwork_forward.1} parent=48 // pred_region
          // Predicated region
          $region65: #{qnetwork_forward.1} parent=52 // pred_check
            _
          $region66: #{qnetwork_forward.1} parent=52 // pred_check_branch
            %406 = sbr.rel (0) target = $region68
          $region67: #{qnetwork_forward.1} parent=52 // pred_region
            loop: start=0, step=1, limit=1
            $region69: #{qnetwork_forward.1} parent=67 // loop_pre_header
              _
            $region70: #{qnetwork_forward.1} parent=67 // loop_header
              %s409 = sphi 0, %s413
              %p410 = scmp.ge.s32.totalorder %s409, 1
              %s414 = sphi [#allocation7], [#allocation7]
              %s415 = sphi %s7, %s7
            $region71: #{qnetwork_forward.1} parent=67 // loop_header_branch
              %412 = sbr.rel (%p410) target = $region75
            $region72: #{qnetwork_forward.1} parent=67 // loop_body
              %v416 = vld [vmem:[%s414] sm:$0x1]
              %417 = vst [vmem:[%s415] sm:$0x1] %v416
            $region73: #{qnetwork_forward.1} parent=67 // loop_footer
              %s413 = sadd.s32 1, %s409
            $region74: #{qnetwork_forward.1} parent=67 // loop_footer_branch
              %408 = sbr.rel target = $region70
            $region75: #{qnetwork_forward.1} parent=67 // loop_exit
              _
          $region68: #{qnetwork_forward.1} parent=52 // pred_fallthru
            _
        $region53: #{qnetwork_forward.1} parent=48 // pred_fallthru
          _
        // Predicated region
        $region54: #{qnetwork_forward.1} parent=48 // pred_check
          _
        $region55: #{qnetwork_forward.1} parent=48 // pred_check_branch
          %393 = sbr.rel (0) target = $region57
        $region56: #{qnetwork_forward.1} parent=48 // pred_region
          loop: start=0, step=1, limit=1
          $region58: #{qnetwork_forward.1} parent=56 // loop_pre_header
            _
          $region59: #{qnetwork_forward.1} parent=56 // loop_header
            %s396 = sphi 0, %s400
            %p397 = scmp.ge.s32.totalorder %s396, 1
            %s401 = sphi [#allocation7], [#allocation7]
            %s402 = sphi %s7, %s7
          $region60: #{qnetwork_forward.1} parent=56 // loop_header_branch
            %399 = sbr.rel (%p397) target = $region64
          $region61: #{qnetwork_forward.1} parent=56 // loop_body
            %v403 = vld [vmem:[%s401] sm:$0x1]
            %404 = vst [vmem:[%s402] sm:$0x1] %v403
          $region62: #{qnetwork_forward.1} parent=56 // loop_footer
            %s400 = sadd.s32 1, %s396
          $region63: #{qnetwork_forward.1} parent=56 // loop_footer_branch
            %395 = sbr.rel target = $region59
          $region64: #{qnetwork_forward.1} parent=56 // loop_exit
            _
        $region57: #{qnetwork_forward.1} parent=48 // pred_fallthru
          _
      $region49: #{qnetwork_forward.1} parent=44 // pred_fallthru
        _
      %418 = vnop
    $region45: #{qnetwork_forward.1} parent=1 // pred_fallthru
      _
    // Predicated region
    $region76: #{qnetwork_forward.1} parent=1 // pred_check
      _
    $region77: #{qnetwork_forward.1} parent=1 // pred_check_branch
      %420 = sbr.rel (0) target = $region79
    $region78: #{qnetwork_forward.1} parent=1 // pred_region
      _
    $region79: #{qnetwork_forward.1} parent=1 // pred_fallthru
      _
    %421 = vsyncpa [#allocation3], 1
    %422 = vsyncpa [#allocation5], 1

</llo_original>
